<compile_context>
chip_gen: v6e
topology: v6e:2x2x1
jax: 0.10.0
libtpu: 0.0.40
codegen_flags: <defaults>
</compile_context>

<pallas_src>
import functools

import jax
import jax.numpy as jnp
from jax.experimental import pallas as pl
from jax.experimental.pallas import tpu as pltpu


def _round_up(x, m):
    return (x + m - 1) // m * m


def _sublane(dtype):
    return 8 if jnp.dtype(dtype).itemsize >= 4 else 16


def _vmem_caps():
    """Generation-aware VMEM limit + tile budget (v7x: 64 MiB/TC, v5e/v6e: 128 MiB)."""
    try:
        cap = int(pltpu.get_tpu_info().vmem_capacity_bytes)
    except Exception:
        cap = 64 * 1024 * 1024  # conservative (v7x-sized) fallback
    limit = int(min(max(cap // 2, 32 * 1024 * 1024), 64 * 1024 * 1024))
    budget = int(limit * 0.6)
    return limit, budget


# ----------------------------------------------------------------------------
# Fast path: stride==1, pad==1 -> in-kernel 3x3 tap accumulation (no im2col).
# ----------------------------------------------------------------------------
def _conv3x3_s1_kernel(w_ref, x_ref, o_ref, *, width, ho_wo, precision):
    # w_ref: (9, Cout_p, Cin)   tap-major weights, resident across the grid
    # x_ref: (1, Cin, Lpad)     one image: height-padded, row-major flattened,
    #                           1 guard zero lane in front, zero tail
    # o_ref: (Cout_p, Ho*Wo)    lane-dense channels-major output for this image
    x2 = x_ref[0]                                              # (Cin, Lpad)
    lane = jax.lax.broadcasted_iota(jnp.int32, o_ref.shape, 1)
    wo = lane % width                                          # output column index

    acc = jnp.zeros(o_ref.shape, jnp.float32)
    for j in range(3):                                         # kernel column
        accj = jnp.zeros(o_ref.shape, jnp.float32)
        for i in range(3):                                     # kernel row
            # source flat index = out_flat + i*W + (j-1) + 1(guard) = out + i*W + j
            start = i * width + j
            tap = x2[:, start:start + ho_wo]                   # (Cin, Ho*Wo)
            accj = accj + jnp.dot(
                w_ref[i * 3 + j], tap,
                preferred_element_type=jnp.float32, precision=precision)
        # mask lanes whose width-tap fell off the image (left/right pad column)
        if j == 0:
            accj = jnp.where(wo >= 1, accj, 0.0)
        elif j == 2:
            accj = jnp.where(wo <= width - 2, accj, 0.0)
        acc = acc + accj
    o_ref[...] = acc.astype(o_ref.dtype)


def _conv3x3_s1_pallas(x, conv_weight, precision):
    B, Cin, H, W = x.shape
    Cout = conv_weight.shape[0]
    Ho, Wo = H, W
    HoWo = Ho * Wo
    Hp = H + 2
    sub = _sublane(x.dtype)
    Cout_p = _round_up(max(Cout, sub), sub)

    # Height-padded, flattened (Cin, Hp*W) slab per image: guard zero lane at
    # q=0, image rows at q = 1 + (h+1)*W + w, zero tail up to Lpad (mult of 128).
    Lpad = _round_up(Hp * W + 2, 128)
    xflat = jnp.zeros((B, Cin, Lpad), x.dtype)
    xflat = xflat.at[:, :, 1 + W:1 + W + H * W].set(x.reshape(B, Cin, H * W))

    # Tap-major weights (9, Cout_p, Cin); tap index = i*3 + j.
    w9 = jnp.transpose(conv_weight, (2, 3, 0, 1)).reshape(9, Cout, Cin)
    w9 = jnp.pad(w9, ((0, 0), (0, Cout_p - Cout), (0, 0)))

    N = B * HoWo                                   # multiple of 128 (gated below)
    vmem_limit, _ = _vmem_caps()
    kernel = functools.partial(
        _conv3x3_s1_kernel, width=W, ho_wo=HoWo, precision=precision)

    out = pl.pallas_call(
        kernel,
        out_shape=jax.ShapeDtypeStruct((Cout_p, N), x.dtype),
        grid_spec=pltpu.PrefetchScalarGridSpec(
            num_scalar_prefetch=0,
            grid=(B,),
            in_specs=[
                pl.BlockSpec((9, Cout_p, Cin), lambda b: (0, 0, 0)),  # weights
                pl.BlockSpec((1, Cin, Lpad), lambda b: (b, 0, 0)),    # image slab
            ],
            out_specs=pl.BlockSpec((Cout_p, HoWo), lambda b: (0, b)),
        ),
        compiler_params=pltpu.CompilerParams(
            dimension_semantics=("parallel",),
            vmem_limit_bytes=vmem_limit,
        ),
    )(w9, xflat)
    return out[:Cout]


# ----------------------------------------------------------------------------
# Fallback path: general stride -> lane-tiled (Cout, K) @ (K, N) matmul.
# ----------------------------------------------------------------------------
def _matmul_kernel(w_ref, p_ref, o_ref, *, precision):
    o_ref[...] = jnp.dot(
        w_ref[...], p_ref[...],
        preferred_element_type=jnp.float32, precision=precision
    ).astype(o_ref.dtype)


def _pick_lane_tile(npad, k, cout_p, itemsize, vmem_budget):
    """Largest 128-multiple lane tile fitting the budget, counting the resident
    weight block, and forcing >= ~4 grid steps for large N (pipelining/megacore)."""
    fixed = 2 * cout_p * k * itemsize                  # double-buffered weights
    usable = max(vmem_budget - fixed, 4 * 1024 * 1024)
    per_lane = 2 * itemsize * (k + cout_p)             # 2x buffers: patches + out
    cap = min(8192, max(128, (usable // per_lane) // 128 * 128))
    if npad > 1024:
        cap = min(cap, max(128, _round_up(pl.cdiv(npad, 4), 128)))
    return min(cap, npad)


def _conv3x3_im2col_pallas(x, conv_weight, stride, padding, precision):
    B, Cin, H, W = x.shape
    Cout, _, KH, KW = conv_weight.shape
    Ho = (H + 2 * padding - KH) // stride + 1
    Wo = (W + 2 * padding - KW) // stride + 1
    N = B * Ho * Wo
    K = Cin * KH * KW
    itemsize = jnp.dtype(x.dtype).itemsize
    sub = _sublane(x.dtype)
    Cout_p = _round_up(max(Cout, sub), sub)
    Npad = _round_up(N, 128)

    # Channels-major first so the im2col reshape is a contiguous merge
    # (no extra HBM transpose pass over the inflated array).
    xc = jnp.transpose(x, (1, 0, 2, 3))                          # (Cin, B, H, W)
    xp = jnp.pad(xc, ((0, 0), (0, 0), (padding, padding), (padding, padding)))
    taps = [xp[:, :, i:i + stride * Ho:stride, j:j + stride * Wo:stride]
            for i in range(KH) for j in range(KW)]               # 9 x (Cin,B,Ho,Wo)
    patches = jnp.stack(taps, axis=1).reshape(K, N)              # (Cin*9, B*Ho*Wo)
    patches = jnp.pad(patches, ((0, 0), (0, Npad - N)))
    wmat = jnp.pad(conv_weight.reshape(Cout, K), ((0, Cout_p - Cout), (0, 0)))

    vmem_limit, vmem_budget = _vmem_caps()
    tn = _pick_lane_tile(Npad, K, Cout_p, itemsize, vmem_budget)
    grid = (pl.cdiv(Npad, tn),)
    kernel = functools.partial(_matmul_kernel, precision=precision)

    out = pl.pallas_call(
        kernel,
        out_shape=jax.ShapeDtypeStruct((Cout_p, Npad), x.dtype),
        grid_spec=pltpu.PrefetchScalarGridSpec(
            num_scalar_prefetch=0,
            grid=grid,
            in_specs=[
                pl.BlockSpec((Cout_p, K), lambda j: (0, 0)),     # resident weights
                pl.BlockSpec((K, tn), lambda j: (0, j)),         # patch lane tile
            ],
            out_specs=pl.BlockSpec((Cout_p, tn), lambda j: (0, j)),
        ),
        compiler_params=pltpu.CompilerParams(
            dimension_semantics=("parallel",),
            vmem_limit_bytes=vmem_limit,
        ),
    )(wmat, patches)
    return out[:Cout, :N], Ho, Wo


# ----------------------------------------------------------------------------
# Module forward
# ----------------------------------------------------------------------------
def subnet1_forward(x, conv_weight, stride=1, padding=1, precision=None):
    """Pallas implementation of SubNet_1.forward.

    x:           (B, Cin, H, W) NCHW, conv_weight: (Cout, Cin, 3, 3) OIHW (no bias).
    Returns (y, B, Cout, Ho, Wo) with y of shape (Cout, B*Ho*Wo) — the module's
    permute(1,0,2,3).view(channels, numel) output.
    `precision=None` uses the fast default MXU precision; pass
    jax.lax.Precision.HIGHEST for exact-f32 conv numerics.
    """
    B, Cin, H, W = x.shape
    Cout, Cin_w, KH, KW = conv_weight.shape
    assert Cin_w == Cin and KH == 3 and KW == 3

    if stride == 1 and padding == 1 and (H * W) % 128 == 0:
        y = _conv3x3_s1_pallas(x, conv_weight, precision)
        Ho, Wo = H, W
    else:
        y, Ho, Wo = _conv3x3_im2col_pallas(x, conv_weight, stride, padding, precision)
    return y, B, Cout, Ho, Wo


def _reference(x, conv_weight, stride=1, padding=1):
    out = jax.lax.conv_general_dilated(
        x, conv_weight,
        window_strides=(stride, stride),
        padding=((padding, padding), (padding, padding)),
        dimension_numbers=("NCHW", "OIHW", "NCHW"),
        precision=jax.lax.Precision.HIGHEST,
    )
    B, Cout, Ho, Wo = out.shape
    return out.transpose(1, 0, 2, 3).reshape(Cout, B * Ho * Wo), B, Cout, Ho, Wo


if __name__ == "__main__":
    # Small config consistent with the module: batch=2, 3 -> 4 channels, 16x16.
    B, Cin, Cout, H, W = 2, 3, 4, 16, 16

    key = jax.random.PRNGKey(0)
    k_x, k_w = jax.random.split(key)
    x = jax.random.normal(k_x, (B, Cin, H, W), dtype=jnp.float32)
    fan_in = Cin * 9                       # kaiming-normal-like init, no bias
    conv_weight = jax.random.normal(k_w, (Cout, Cin, 3, 3), jnp.float32)
    conv_weight = conv_weight * jnp.sqrt(2.0 / fan_in)

    # --- stride=1: fast in-kernel tap-sum path ------------------------------
    ref1, rb1, rc1, rh1, rw1 = _reference(x, conv_weight, stride=1)

    y1, b1, c1, h1, w1 = subnet1_forward(x, conv_weight, stride=1)   # default MXU prec
    y1 = jax.block_until_ready(y1)
    assert (b1, c1, h1, w1) == (rb1, rc1, rh1, rw1)
    assert y1.shape == ref1.shape == (Cout, B * H * W)
    assert jnp.allclose(y1, ref1, atol=5e-2, rtol=5e-2)              # bf16-pass MXU

    y1h, *_ = subnet1_forward(x, conv_weight, stride=1,
                              precision=jax.lax.Precision.HIGHEST)
    y1h = jax.block_until_ready(y1h)
    assert jnp.allclose(y1h, ref1, atol=1e-4, rtol=1e-4)             # exact-f32 mode

    # --- stride=2: general im2col fallback path -----------------------------
    ref2, rb2, rc2, rh2, rw2 = _reference(x, conv_weight, stride=2)
    y2, b2, c2, h2, w2 = subnet1_forward(x, conv_weight, stride=2,
                                         precision=jax.lax.Precision.HIGHEST)
    y2 = jax.block_until_ready(y2)
    assert (b2, c2, h2, w2) == (rb2, rc2, rh2, rw2)
    assert y2.shape == ref2.shape
    assert jnp.allclose(y2, ref2, atol=1e-4, rtol=1e-4)

    print("KERNEL_OK")
</pallas_src>

<mosaic_0001>
module attributes {stable_mosaic.version = 11 : i64} {
  func.func @_conv3x3_s1_kernel(%arg0: i32, %arg1: memref<9x8x3xf32, #tpu.memory_space<vmem>>, %arg2: memref<1x3x384xf32, #tpu.memory_space<vmem>>, %arg3: memref<8x256xf32, #tpu.memory_space<vmem>>) attributes {dimension_semantics = [#tpu.dimension_semantics<parallel>], iteration_bounds = array<i64: 2>, scalar_prefetch = 0 : i64, scratch_operands = 0 : i64, tpu.core_type = #tpu.core_type<tc>, window_params = [{pipeline_mode = #tpu.pipeline_mode<synchronous>, transform_indices = @transform_0, window_bounds = array<i64: 9, 8, 3>}, {transform_indices = @transform_1, window_bounds = array<i64: 1, 3, 384>}, {transform_indices = @transform_2, window_bounds = array<i64: 8, 256>}]} {
    %c0 = arith.constant 0 : index
    %c0_0 = arith.constant 0 : index
    %c0_1 = arith.constant 0 : index
    %0 = vector.load %arg2[%c0, %c0_0, %c0_1] : memref<1x3x384xf32, #tpu.memory_space<vmem>>, vector<1x3x384xf32>
    %1 = vector.shape_cast %0 : vector<1x3x384xf32> to vector<3x384xf32>
    %2 = tpu.iota {dimensions = array<i32: 1>} : vector<8x256xi32>
    %c16_i32 = arith.constant 16 : i32
    %c0_i32 = arith.constant 0 : i32
    %3 = arith.cmpi eq, %c16_i32, %c0_i32 : i32
    %c1_i32 = arith.constant 1 : i32
    %4 = arith.select %3, %c1_i32, %c16_i32 : i32
    %5 = vector.broadcast %4 : i32 to vector<8x256xi32>
    %6 = arith.remsi %2, %5 : vector<8x256xi32>
    %c0_i32_2 = arith.constant 0 : i32
    %7 = vector.broadcast %c0_i32_2 : i32 to vector<8x256xi32>
    %8 = arith.cmpi ne, %6, %7 : vector<8x256xi32>
    %c0_i32_3 = arith.constant 0 : i32
    %9 = vector.broadcast %c0_i32_3 : i32 to vector<8x256xi32>
    %10 = arith.cmpi slt, %6, %9 : vector<8x256xi32>
    %c0_i32_4 = arith.constant 0 : i32
    %11 = arith.cmpi slt, %4, %c0_i32_4 : i32
    %12 = vector.broadcast %11 : i1 to vector<8x256xi1>
    %13 = vector.broadcast %12 : vector<8x256xi1> to vector<8x256xi1>
    %14 = arith.xori %10, %13 : vector<8x256xi1>
    %15 = arith.andi %14, %8 : vector<8x256xi1>
    %16 = vector.broadcast %4 : i32 to vector<8x256xi32>
    %17 = arith.addi %6, %16 : vector<8x256xi32>
    %18 = arith.select %15, %17, %6 : vector<8x256xi1>, vector<8x256xi32>
    %cst = arith.constant 0.000000e+00 : f32
    %19 = vector.broadcast %cst : f32 to vector<8x256xf32>
    %cst_5 = arith.constant 0.000000e+00 : f32
    %20 = vector.broadcast %cst_5 : f32 to vector<8x256xf32>
    %21 = vector.extract_strided_slice %1 {offsets = [0, 0], sizes = [3, 256], strides = [1, 1]} : vector<3x384xf32> to vector<3x256xf32>
    %c0_6 = arith.constant 0 : index
    %c0_7 = arith.constant 0 : index
    %c0_8 = arith.constant 0 : index
    %22 = vector.load %arg1[%c0_6, %c0_7, %c0_8] : memref<9x8x3xf32, #tpu.memory_space<vmem>>, vector<1x8x3xf32>
    %23 = vector.shape_cast %22 : vector<1x8x3xf32> to vector<8x3xf32>
    %cst_9 = arith.constant dense<0.000000e+00> : vector<8x256xf32>
    %24 = tpu.matmul %23, %21, %cst_9 {dimension_numbers = #tpu.dot_dimension_numbers<[1], [0], [0], [1], [0, 0, 1, 1], [], []>} : vector<8x3xf32>, vector<3x256xf32>, vector<8x256xf32> -> vector<8x256xf32>
    %25 = arith.addf %20, %24 : vector<8x256xf32>
    %26 = vector.extract_strided_slice %1 {offsets = [0, 16], sizes = [3, 256], strides = [1, 1]} : vector<3x384xf32> to vector<3x256xf32>
    %c3 = arith.constant 3 : index
    %c0_10 = arith.constant 0 : index
    %c0_11 = arith.constant 0 : index
    %27 = vector.load %arg1[%c3, %c0_10, %c0_11] : memref<9x8x3xf32, #tpu.memory_space<vmem>>, vector<1x8x3xf32>
    %28 = vector.shape_cast %27 : vector<1x8x3xf32> to vector<8x3xf32>
    %cst_12 = arith.constant dense<0.000000e+00> : vector<8x256xf32>
    %29 = tpu.matmul %28, %26, %cst_12 {dimension_numbers = #tpu.dot_dimension_numbers<[1], [0], [0], [1], [0, 0, 1, 1], [], []>} : vector<8x3xf32>, vector<3x256xf32>, vector<8x256xf32> -> vector<8x256xf32>
    %30 = arith.addf %25, %29 : vector<8x256xf32>
    %31 = vector.extract_strided_slice %1 {offsets = [0, 32], sizes = [3, 256], strides = [1, 1]} : vector<3x384xf32> to vector<3x256xf32>
    %c6 = arith.constant 6 : index
    %c0_13 = arith.constant 0 : index
    %c0_14 = arith.constant 0 : index
    %32 = vector.load %arg1[%c6, %c0_13, %c0_14] : memref<9x8x3xf32, #tpu.memory_space<vmem>>, vector<1x8x3xf32>
    %33 = vector.shape_cast %32 : vector<1x8x3xf32> to vector<8x3xf32>
    %cst_15 = arith.constant dense<0.000000e+00> : vector<8x256xf32>
    %34 = tpu.matmul %33, %31, %cst_15 {dimension_numbers = #tpu.dot_dimension_numbers<[1], [0], [0], [1], [0, 0, 1, 1], [], []>} : vector<8x3xf32>, vector<3x256xf32>, vector<8x256xf32> -> vector<8x256xf32>
    %35 = arith.addf %30, %34 : vector<8x256xf32>
    %c1_i32_16 = arith.constant 1 : i32
    %36 = vector.broadcast %c1_i32_16 : i32 to vector<8x256xi32>
    %37 = arith.cmpi sge, %18, %36 : vector<8x256xi32>
    %cst_17 = arith.constant 0.000000e+00 : f32
    %38 = vector.broadcast %cst_17 : f32 to vector<8x256xf32>
    %39 = arith.select %37, %35, %38 : vector<8x256xi1>, vector<8x256xf32>
    %40 = arith.addf %19, %39 : vector<8x256xf32>
    %cst_18 = arith.constant 0.000000e+00 : f32
    %41 = vector.broadcast %cst_18 : f32 to vector<8x256xf32>
    %42 = vector.extract_strided_slice %1 {offsets = [0, 1], sizes = [3, 256], strides = [1, 1]} : vector<3x384xf32> to vector<3x256xf32>
    %c1 = arith.constant 1 : index
    %c0_19 = arith.constant 0 : index
    %c0_20 = arith.constant 0 : index
    %43 = vector.load %arg1[%c1, %c0_19, %c0_20] : memref<9x8x3xf32, #tpu.memory_space<vmem>>, vector<1x8x3xf32>
    %44 = vector.shape_cast %43 : vector<1x8x3xf32> to vector<8x3xf32>
    %cst_21 = arith.constant dense<0.000000e+00> : vector<8x256xf32>
    %45 = tpu.matmul %44, %42, %cst_21 {dimension_numbers = #tpu.dot_dimension_numbers<[1], [0], [0], [1], [0, 0, 1, 1], [], []>} : vector<8x3xf32>, vector<3x256xf32>, vector<8x256xf32> -> vector<8x256xf32>
    %46 = arith.addf %41, %45 : vector<8x256xf32>
    %47 = vector.extract_strided_slice %1 {offsets = [0, 17], sizes = [3, 256], strides = [1, 1]} : vector<3x384xf32> to vector<3x256xf32>
    %c4 = arith.constant 4 : index
    %c0_22 = arith.constant 0 : index
    %c0_23 = arith.constant 0 : index
    %48 = vector.load %arg1[%c4, %c0_22, %c0_23] : memref<9x8x3xf32, #tpu.memory_space<vmem>>, vector<1x8x3xf32>
    %49 = vector.shape_cast %48 : vector<1x8x3xf32> to vector<8x3xf32>
    %cst_24 = arith.constant dense<0.000000e+00> : vector<8x256xf32>
    %50 = tpu.matmul %49, %47, %cst_24 {dimension_numbers = #tpu.dot_dimension_numbers<[1], [0], [0], [1], [0, 0, 1, 1], [], []>} : vector<8x3xf32>, vector<3x256xf32>, vector<8x256xf32> -> vector<8x256xf32>
    %51 = arith.addf %46, %50 : vector<8x256xf32>
    %52 = vector.extract_strided_slice %1 {offsets = [0, 33], sizes = [3, 256], strides = [1, 1]} : vector<3x384xf32> to vector<3x256xf32>
    %c7 = arith.constant 7 : index
    %c0_25 = arith.constant 0 : index
    %c0_26 = arith.constant 0 : index
    %53 = vector.load %arg1[%c7, %c0_25, %c0_26] : memref<9x8x3xf32, #tpu.memory_space<vmem>>, vector<1x8x3xf32>
    %54 = vector.shape_cast %53 : vector<1x8x3xf32> to vector<8x3xf32>
    %cst_27 = arith.constant dense<0.000000e+00> : vector<8x256xf32>
    %55 = tpu.matmul %54, %52, %cst_27 {dimension_numbers = #tpu.dot_dimension_numbers<[1], [0], [0], [1], [0, 0, 1, 1], [], []>} : vector<8x3xf32>, vector<3x256xf32>, vector<8x256xf32> -> vector<8x256xf32>
    %56 = arith.addf %51, %55 : vector<8x256xf32>
    %57 = arith.addf %40, %56 : vector<8x256xf32>
    %cst_28 = arith.constant 0.000000e+00 : f32
    %58 = vector.broadcast %cst_28 : f32 to vector<8x256xf32>
    %59 = vector.extract_strided_slice %1 {offsets = [0, 2], sizes = [3, 256], strides = [1, 1]} : vector<3x384xf32> to vector<3x256xf32>
    %c2 = arith.constant 2 : index
    %c0_29 = arith.constant 0 : index
    %c0_30 = arith.constant 0 : index
    %60 = vector.load %arg1[%c2, %c0_29, %c0_30] : memref<9x8x3xf32, #tpu.memory_space<vmem>>, vector<1x8x3xf32>
    %61 = vector.shape_cast %60 : vector<1x8x3xf32> to vector<8x3xf32>
    %cst_31 = arith.constant dense<0.000000e+00> : vector<8x256xf32>
    %62 = tpu.matmul %61, %59, %cst_31 {dimension_numbers = #tpu.dot_dimension_numbers<[1], [0], [0], [1], [0, 0, 1, 1], [], []>} : vector<8x3xf32>, vector<3x256xf32>, vector<8x256xf32> -> vector<8x256xf32>
    %63 = arith.addf %58, %62 : vector<8x256xf32>
    %64 = vector.extract_strided_slice %1 {offsets = [0, 18], sizes = [3, 256], strides = [1, 1]} : vector<3x384xf32> to vector<3x256xf32>
    %c5 = arith.constant 5 : index
    %c0_32 = arith.constant 0 : index
    %c0_33 = arith.constant 0 : index
    %65 = vector.load %arg1[%c5, %c0_32, %c0_33] : memref<9x8x3xf32, #tpu.memory_space<vmem>>, vector<1x8x3xf32>
    %66 = vector.shape_cast %65 : vector<1x8x3xf32> to vector<8x3xf32>
    %cst_34 = arith.constant dense<0.000000e+00> : vector<8x256xf32>
    %67 = tpu.matmul %66, %64, %cst_34 {dimension_numbers = #tpu.dot_dimension_numbers<[1], [0], [0], [1], [0, 0, 1, 1], [], []>} : vector<8x3xf32>, vector<3x256xf32>, vector<8x256xf32> -> vector<8x256xf32>
    %68 = arith.addf %63, %67 : vector<8x256xf32>
    %69 = vector.extract_strided_slice %1 {offsets = [0, 34], sizes = [3, 256], strides = [1, 1]} : vector<3x384xf32> to vector<3x256xf32>
    %c8 = arith.constant 8 : index
    %c0_35 = arith.constant 0 : index
    %c0_36 = arith.constant 0 : index
    %70 = vector.load %arg1[%c8, %c0_35, %c0_36] : memref<9x8x3xf32, #tpu.memory_space<vmem>>, vector<1x8x3xf32>
    %71 = vector.shape_cast %70 : vector<1x8x3xf32> to vector<8x3xf32>
    %cst_37 = arith.constant dense<0.000000e+00> : vector<8x256xf32>
    %72 = tpu.matmul %71, %69, %cst_37 {dimension_numbers = #tpu.dot_dimension_numbers<[1], [0], [0], [1], [0, 0, 1, 1], [], []>} : vector<8x3xf32>, vector<3x256xf32>, vector<8x256xf32> -> vector<8x256xf32>
    %73 = arith.addf %68, %72 : vector<8x256xf32>
    %c14_i32 = arith.constant 14 : i32
    %74 = vector.broadcast %c14_i32 : i32 to vector<8x256xi32>
    %75 = arith.cmpi sle, %18, %74 : vector<8x256xi32>
    %cst_38 = arith.constant 0.000000e+00 : f32
    %76 = vector.broadcast %cst_38 : f32 to vector<8x256xf32>
    %77 = arith.select %75, %73, %76 : vector<8x256xi1>, vector<8x256xf32>
    %78 = arith.addf %57, %77 : vector<8x256xf32>
    %c0_39 = arith.constant 0 : index
    %c0_40 = arith.constant 0 : index
    %79 = vector.load %arg3[%c0_39, %c0_40] : memref<8x256xf32, #tpu.memory_space<vmem>>, vector<8x256xf32>
    tpu.vector_store %arg3[%c0_39, %c0_40], %78 {strides = array<i32>} : memref<8x256xf32, #tpu.memory_space<vmem>>, vector<8x256xf32>,
    return
  }
  func.func @transform_0(%arg0: i32) -> (i32, i32, i32) {
    %c0_i32 = arith.constant 0 : i32
    %c0_i32_0 = arith.constant 0 : i32
    %c0_i32_1 = arith.constant 0 : i32
    %c0_i32_2 = arith.constant 0 : i32
    return %c0_i32, %c0_i32_0, %c0_i32_1 : i32, i32, i32
  }
  func.func @transform_1(%arg0: i32) -> (i32, i32, i32) {
    %c0_i32 = arith.constant 0 : i32
    %c0_i32_0 = arith.constant 0 : i32
    %c0_i32_1 = arith.constant 0 : i32
    return %arg0, %c0_i32, %c0_i32_0 : i32, i32, i32
  }
  func.func @transform_2(%arg0: i32) -> (i32, i32) {
    %c0_i32 = arith.constant 0 : i32
    %c0_i32_0 = arith.constant 0 : i32
    return %c0_i32, %arg0 : i32, i32
  }
}

</mosaic_0001>

<llo_original>
// kernel: tpu_custom_call.1
$region0: #{tpu_custom_call.1}
  #allocation0 [shape = 'u32[]', space=smem, size = 0x4, offset = 0x4, fixed_abs, tag = 'smem constant byte address 0x4 - core index']
  #allocation1 [shape = 'u32[144,128]{1,0:T(1,128)}', space=vmem, size = 0x12000, scoped, tag = 'internal scratch']
  %s0 = inlined_call_operand.vmem [shape: f32[9,8,3], index: 0, kind: input, shape index: {}]
  %s1 = inlined_call_operand.vmem [shape: f32[2,3,384], index: 1, kind: input, shape index: {}]
  %s2 = inlined_call_operand.hbm [shape: f32[8,512], index: 2, kind: output, shape index: {}]
  %s3 = sld [smem:[#allocation0]]
  $region41: #{tpu_custom_call.1} parent=0
    _
  %s5 = ssub.s32 1, %s3
  %s6 = scalar_select 0, %s5, %s3
  $region1: #{tpu_custom_call.1} parent=0
    #allocation2 [shape = 'u8[16384]{0}', space=vmem, size = 0x4000, scoped, tag = 'output window, operand 0']
    #allocation3 [shape = 's32[2]{0}', space=sflag, size = 0x8, scoped, tag = 'scoped memory for tpu_custom_call.1']
    %7 = vsyncpa [#allocation3], 0
    %s8 = scalar_lea.sflag [#allocation3], 1
    %9 = vsyncpa %s8, 0
    loop: start=0, step=1, limit=4
    $region2: #{tpu_custom_call.1} parent=1 // loop_pre_header
      _
    $region3: #{tpu_custom_call.1} parent=1 // loop_header
      %s11 = sphi 0, %s15
      %p12 = scmp.ge.s32.totalorder %s11, 4
      %s19 = sphi 0, %s19
      %s21 = sphi 0, %s19
      %s22 = sphi 0, %s21
      %s36 = sphi 0, %s22
      %s42 = sphi 0, %s44
      %s45 = sphi 0, %s42
      %s46 = sphi 0, %s45
      %s62 = sphi 0, %s46
      %s68 = sphi 0, %s70
      %s71 = sphi 0, %s68
      %s72 = sphi 0, %s71
      %s88 = sphi 0, %s72
    $region4: #{tpu_custom_call.1} parent=1 // loop_header_branch
      %14 = sbr.rel (%p12) target = $region8
    $region5: #{tpu_custom_call.1} parent=1 // loop_body
      %s16 = ssub.s32 %s11, 1
      %s17 = ssub.s32 %s11, 2
      %s18 = sadd.s32 %s11, 1
      %s20 = sadd.s32 %s19, 1
      %p23 = scmp.eq.s32.totalorder %s11, 1
      %p24 = scmp.ne.s32.totalorder %s19, %s21
      %p25 = scmp.eq.s32.totalorder %s11, 0
      %p26 = por %p24, %p25
      %p27 = scmp.ne.s32.totalorder %s19, %s21
      %p28 = scmp.eq.s32.totalorder %s16, 1
      %p29 = por %p27, %p28
      %p30 = scmp.ne.s32.totalorder %s21, %s22
      %p31 = scmp.eq.s32.totalorder %s16, 0
      %p32 = por %p30, %p31
      %p33 = scmp.ne.s32.totalorder %s21, %s22
      %p34 = scmp.eq.s32.totalorder %s17, 1
      %p35 = por %p33, %p34
      %p37 = scmp.ne.s32.totalorder %s22, %s36
      %p38 = scmp.eq.s32.totalorder %s17, 0
      %p39 = por %p37, %p38
      %s40 = ssub.s32 %s11, %s18
      %p41 = scmp.eq.s32.totalorder %s40, 0
      %s43 = sadd.s32 %s42, 1
      %s44 = scalar_select %p41, %s42, %s43
      %p47 = pneg %p41
      %p48 = scmp.eq.s32.totalorder %s11, 1
      %p49 = por %p47, %p48
      %p50 = scmp.ne.s32.totalorder %s42, %s45
      %p51 = scmp.eq.s32.totalorder %s11, 0
      %p52 = por %p50, %p51
      %p53 = scmp.ne.s32.totalorder %s42, %s45
      %p54 = scmp.eq.s32.totalorder %s16, 1
      %p55 = por %p53, %p54
      %p56 = scmp.ne.s32.totalorder %s45, %s46
      %p57 = scmp.eq.s32.totalorder %s16, 0
      %p58 = por %p56, %p57
      %p59 = scmp.ne.s32.totalorder %s45, %s46
      %p60 = scmp.eq.s32.totalorder %s17, 1
      %p61 = por %p59, %p60
      %p63 = scmp.ne.s32.totalorder %s46, %s62
      %p64 = scmp.eq.s32.totalorder %s17, 0
      %p65 = por %p63, %p64
      %s66 = ssub.s32 %s11, %s18
      %p67 = scmp.eq.s32.totalorder %s66, 0
      %s69 = sadd.s32 %s68, 1
      %s70 = scalar_select %p67, %s68, %s69
      %p73 = pneg %p67
      %p74 = scmp.eq.s32.totalorder %s11, 1
      %p75 = por %p73, %p74
      %p76 = scmp.ne.s32.totalorder %s68, %s71
      %p77 = scmp.eq.s32.totalorder %s11, 0
      %p78 = por %p76, %p77
      %p79 = scmp.ne.s32.totalorder %s68, %s71
      %p80 = scmp.eq.s32.totalorder %s16, 1
      %p81 = por %p79, %p80
      %p82 = scmp.ne.s32.totalorder %s71, %s72
      %p83 = scmp.eq.s32.totalorder %s16, 0
      %p84 = por %p82, %p83
      %p85 = scmp.ne.s32.totalorder %s71, %s72
      %p86 = scmp.eq.s32.totalorder %s17, 1
      %p87 = por %p85, %p86
      %p89 = scmp.ne.s32.totalorder %s72, %s88
      %p90 = scmp.eq.s32.totalorder %s17, 0
      %p91 = por %p89, %p90
      %p92 = scmp.le.s32.totalorder 1, %s11
      %p93 = scmp.lt.s32.totalorder %s11, 3
      %p94 = pnand %p92, %p93
      %p95 = pneg %p94
      // Predicated region
      $region9: #{tpu_custom_call.1} parent=5 // pred_check
        _
      $region10: #{tpu_custom_call.1} parent=5 // pred_check_branch
        %97 = sbr.rel (%p94) target = $region12
      $region11: #{tpu_custom_call.1} parent=5 // pred_region
        %s98 = ssub.s32 %s11, 1
        // Predicated region
        $region13: #{tpu_custom_call.1} parent=11 // pred_check
          %p99 = pneg %p32
        $region14: #{tpu_custom_call.1} parent=11 // pred_check_branch
          %101 = sbr.rel (%p99) target = $region16
        $region15: #{tpu_custom_call.1} parent=11 // pred_region
          _
        $region16: #{tpu_custom_call.1} parent=11 // pred_fallthru
          _
      $region12: #{tpu_custom_call.1} parent=5 // pred_fallthru
        _
      %p102 = scmp.lt.s32.totalorder %s11, 2
      // Predicated region
      $region17: #{tpu_custom_call.1} parent=5 // pred_check
        %p103 = pneg %p102
      $region18: #{tpu_custom_call.1} parent=5 // pred_check_branch
        %105 = sbr.rel (%p103) target = $region20
      $region19: #{tpu_custom_call.1} parent=5 // pred_region
        // Predicated region
        $region21: #{tpu_custom_call.1} parent=19 // pred_check
          %p106 = pneg %p52
        $region22: #{tpu_custom_call.1} parent=19 // pred_check_branch
          %108 = sbr.rel (%p106) target = $region24
        $region23: #{tpu_custom_call.1} parent=19 // pred_region
          %p109 = scmp.lt.s32.totalorder %s11, 1
          %s110 = scalar_select %p109, %s11, 1
          %s111 = smul.addr %s110, 3
          %s112 = smul.addr %s111, 4
          %s113 = scalar_lea.vmem %s1, %s112
        $region24: #{tpu_custom_call.1} parent=19 // pred_fallthru
          _
      $region20: #{tpu_custom_call.1} parent=5 // pred_fallthru
        _
      %p114 = scmp.le.s32.totalorder 1, %s11
      %p115 = scmp.lt.s32.totalorder %s11, 3
      %p116 = pnand %p114, %p115
      %p117 = pneg %p116
      // Predicated region
      $region25: #{tpu_custom_call.1} parent=5 // pred_check
        _
      $region26: #{tpu_custom_call.1} parent=5 // pred_check_branch
        %119 = sbr.rel (%p116) target = $region28
      $region27: #{tpu_custom_call.1} parent=5 // pred_region
        %s120 = ssub.s32 %s11, 1
        %p121 = pneg %p32
        %p122 = pneg %p29
        %p123 = scmp.lt.s32.totalorder %s16, 1
        %s124 = scalar_select %p123, %s16, 1
        %s125 = smul.addr %s124, 3
        %s126 = smul.addr %s125, 4
        %s127 = scalar_lea.vmem %s1, %s126
        %p128 = pneg %p58
        %p129 = pneg %p55
        %p130 = pneg %p84
        %p131 = pneg %p81
        %s132 = sand.u32 %s71, 1
        %s133 = scalar_lea.sflag [#allocation3], %s132
        %s134 = sand.u32 %s71, 1
        %s135 = smul.addr %s134, 16
        %s136 = scalar_lea.vmem [#allocation2], %s135
        %p137 = scmp.lt.s32.totalorder %s16, 1
        %s138 = scalar_select %p137, %s16, 1
        %s139 = smul.addr %s138, 3
        %s140 = smul.addr %s139, 4
        %s141 = scalar_lea.vmem %s1, %s140
        %s142 = smul.u32 2, %s16
        %v143 = vld [vmem:[%s141] sm:$0x77]
        %v144 = vld [vmem:[%s141 + $0x8] sm:$0x7]
        %v145 = vlaneseq
        %v146 = vand.u32 %v145, 127
        %v147 = vadd.s32 %v146, 128
        %vm148 = vcmp.lt.s32.totalorder %v146, 0
        %v149 = vsub.s32 0, %v146
        %v150 = vsel %vm148, %v149, %v146
        %v151 = vshrl.u32 %v150, 4
        %v152 = vand.u32 %v150, 15
        %v153 = vsub.s32 0, %v152
        %v154 = vsel %vm148, %v153, %v152
        %vm155 = vcmp.lt.s32.totalorder %v147, 0
        %v156 = vsub.s32 0, %v147
        %v157 = vsel %vm155, %v156, %v147
        %v158 = vshrl.u32 %v157, 4
        %v159 = vand.u32 %v157, 15
        %v160 = vsub.s32 0, %v159
        %v161 = vsel %vm155, %v160, %v159
        %vm162 = vcmp.ne.s32.totalorder %v154, 0
        %vm163 = vcmp.ne.s32.totalorder %v161, 0
        %vm164 = vcmp.lt.s32.totalorder %v154, 0
        %vm165 = vcmp.lt.s32.totalorder %v161, 0
        %vm166 = vmand %vm164, %vm162
        %vm167 = vmand %vm165, %vm163
        %v168 = vadd.s32 %v154, 16
        %v169 = vadd.s32 %v161, 16
        %v170 = vsel %vm166, %v168, %v154
        %v171 = vsel %vm167, %v169, %v161
        %v172 = vld [vmem:[%s0] sm:$0xff]
        %s173 = scalar_lea.vmem %s0, 24
        %v174 = vld [vmem:[%s173] sm:$0xff]
        %v177 = vcombine.high %v143, %v143
        %178 = vrot.lane.b32.xlu0 %v143, 112
        %v179 = vpop.permute.xlu0 %178
        %180 = vrot.lane.b32.xlu0 %v177, 112
        %v181 = vpop.permute.xlu0 %180
        %182 = vrot.lane.b32.xlu0 %v144, 112
        %v183 = vpop.permute.xlu0 %182
        %vm184 = vcmask 916480
        %v185 = vsel %vm184, %v179, %v181
        %v186 = vsel %vm184, %v181, %v183
        %vm187 = vcmask 23552
        %v189 = vsel %vm187, %v174, 0
        %vm191 = vcmask 1042432
        %v192 = vsel %vm191, %v185, 0
        %v194 = vsel %vm191, %v186, 0
        %196 = vmatprep.subr.mxu0 0.0
        %197 = vmatpush1.msra.mxu0 0.0
        %198 = vmatprep.subr.mxu0 0.0
        %199 = vmatpush1.msra.mxu0 0.0
        %200 = vmatprep.subr.mxu0 0.0
        %201 = vmatpush1.msra.mxu0 0.0
        %202 = vmatprep.subr.mxu0 0.0
        %203 = vmatpush1.msra.mxu0 0.0
        %204 = vmatprep.subr.mxu0 0.0
        %205 = vmatpush1.msra.mxu0 0.0
        %206 = vmatprep.subr.mxu0 0.0
        %207 = vmatpush1.msra.mxu0 0.0
        %208 = vmatprep.subr.mxu0 0.0
        %209 = vmatpush1.msra.mxu0 0.0
        %210 = vmatprep.subr.mxu0 0.0
        %211 = vmatpush1.msra.mxu0 0.0
        %212 = vmatprep.subr.mxu0 0.0
        %213 = vmatpush1.msra.mxu0 0.0
        %214 = vmatprep.subr.mxu0 0.0
        %215 = vmatpush1.msra.mxu0 0.0
        %216 = vmatprep.subr.mxu0 0.0
        %217 = vmatpush1.msra.mxu0 0.0
        %218 = vmatprep.subr.mxu0 0.0
        %219 = vmatpush1.msra.mxu0 0.0
        %220 = vmatprep.subr.mxu0 0.0
        %221 = vmatpush1.msra.mxu0 0.0
        %222 = vmatprep.subr.mxu0 0.0
        %223 = vmatpush1.msra.mxu0 0.0
        %224 = vmatprep.subr.mxu0 0.0
        %225 = vmatpush1.msra.mxu0 0.0
        %226 = vmatprep.subr.mxu0 %v194
        %227 = vmatpush1.msra.mxu0 %v192
        %228 = vmatprep.subr.mxu0 0.0
        %229 = vmatpush2.msra.mxu0 0.0
        %230 = vmatprep.subr.mxu0 0.0
        %231 = vmatpush2.msra.mxu0 0.0
        %232 = vmatprep.subr.mxu0 0.0
        %233 = vmatpush2.msra.mxu0 0.0
        %234 = vmatprep.subr.mxu0 0.0
        %235 = vmatpush2.msra.mxu0 0.0
        %236 = vmatprep.subr.mxu0 0.0
        %237 = vmatpush2.msra.mxu0 0.0
        %238 = vmatprep.subr.mxu0 0.0
        %239 = vmatpush2.msra.mxu0 0.0
        %240 = vmatprep.subr.mxu0 0.0
        %241 = vmatpush2.msra.mxu0 0.0
        %242 = vmatprep.subr.mxu0 0.0
        %243 = vmatpush2.msra.mxu0 0.0
        %244 = vmatprep.subr.mxu0 0.0
        %245 = vmatpush2.msra.mxu0 0.0
        %246 = vmatprep.subr.mxu0 0.0
        %247 = vmatpush2.msra.mxu0 0.0
        %248 = vmatprep.subr.mxu0 0.0
        %249 = vmatpush2.msra.mxu0 0.0
        %250 = vmatprep.subr.mxu0 0.0
        %251 = vmatpush2.msra.mxu0 0.0
        %252 = vmatprep.subr.mxu0 0.0
        %253 = vmatpush2.msra.mxu0 0.0
        %254 = vmatprep.subr.mxu0 0.0
        %255 = vmatpush2.msra.mxu0 0.0
        %256 = vmatprep.subr.mxu0 0.0
        %257 = vmatpush2.msra.mxu0 0.0
        %258 = vmatprep.subr.mxu0 0.0
        %259 = vmatpush2.msra.mxu0 0.0
        %260 = vmatprep.mubr.f32.mxu0 0.0
        %261 = vmatmul.mubr.f32.gmra.mxu0 %v189
        %v262 = vpop.f32.mrf.mxu0
        %v263 = vadd.f32 0.0, %v262
        %v264 = vpop.f32.mrf.mxu0
        %v265 = vadd.f32 0.0, %v264
        %266 = vdwg.mxu0
        %v268 = vsel %vm187, %v172, 0
        %v270 = vsel %vm191, %v143, 0
        %v272 = vsel %vm191, %v177, 0
        %274 = vmatprep.subr.mxu0 0.0
        %275 = vmatpush1.msra.mxu0 0.0
        %276 = vmatprep.subr.mxu0 0.0
        %277 = vmatpush1.msra.mxu0 0.0
        %278 = vmatprep.subr.mxu0 0.0
        %279 = vmatpush1.msra.mxu0 0.0
        %280 = vmatprep.subr.mxu0 0.0
        %281 = vmatpush1.msra.mxu0 0.0
        %282 = vmatprep.subr.mxu0 0.0
        %283 = vmatpush1.msra.mxu0 0.0
        %284 = vmatprep.subr.mxu0 0.0
        %285 = vmatpush1.msra.mxu0 0.0
        %286 = vmatprep.subr.mxu0 0.0
        %287 = vmatpush1.msra.mxu0 0.0
        %288 = vmatprep.subr.mxu0 0.0
        %289 = vmatpush1.msra.mxu0 0.0
        %290 = vmatprep.subr.mxu0 0.0
        %291 = vmatpush1.msra.mxu0 0.0
        %292 = vmatprep.subr.mxu0 0.0
        %293 = vmatpush1.msra.mxu0 0.0
        %294 = vmatprep.subr.mxu0 0.0
        %295 = vmatpush1.msra.mxu0 0.0
        %296 = vmatprep.subr.mxu0 0.0
        %297 = vmatpush1.msra.mxu0 0.0
        %298 = vmatprep.subr.mxu0 0.0
        %299 = vmatpush1.msra.mxu0 0.0
        %300 = vmatprep.subr.mxu0 0.0
        %301 = vmatpush1.msra.mxu0 0.0
        %302 = vmatprep.subr.mxu0 0.0
        %303 = vmatpush1.msra.mxu0 0.0
        %304 = vmatprep.subr.mxu0 %v272
        %305 = vmatpush1.msra.mxu0 %v270
        %306 = vmatprep.subr.mxu0 0.0
        %307 = vmatpush2.msra.mxu0 0.0
        %308 = vmatprep.subr.mxu0 0.0
        %309 = vmatpush2.msra.mxu0 0.0
        %310 = vmatprep.subr.mxu0 0.0
        %311 = vmatpush2.msra.mxu0 0.0
        %312 = vmatprep.subr.mxu0 0.0
        %313 = vmatpush2.msra.mxu0 0.0
        %314 = vmatprep.subr.mxu0 0.0
        %315 = vmatpush2.msra.mxu0 0.0
        %316 = vmatprep.subr.mxu0 0.0
        %317 = vmatpush2.msra.mxu0 0.0
        %318 = vmatprep.subr.mxu0 0.0
        %319 = vmatpush2.msra.mxu0 0.0
        %320 = vmatprep.subr.mxu0 0.0
        %321 = vmatpush2.msra.mxu0 0.0
        %322 = vmatprep.subr.mxu0 0.0
        %323 = vmatpush2.msra.mxu0 0.0
        %324 = vmatprep.subr.mxu0 0.0
        %325 = vmatpush2.msra.mxu0 0.0
        %326 = vmatprep.subr.mxu0 0.0
        %327 = vmatpush2.msra.mxu0 0.0
        %328 = vmatprep.subr.mxu0 0.0
        %329 = vmatpush2.msra.mxu0 0.0
        %330 = vmatprep.subr.mxu0 0.0
        %331 = vmatpush2.msra.mxu0 0.0
        %332 = vmatprep.subr.mxu0 0.0
        %333 = vmatpush2.msra.mxu0 0.0
        %334 = vmatprep.subr.mxu0 0.0
        %335 = vmatpush2.msra.mxu0 0.0
        %336 = vmatprep.subr.mxu0 0.0
        %337 = vmatpush2.msra.mxu0 0.0
        %338 = vmatprep.mubr.f32.mxu0 0.0
        %339 = vmatmul.mubr.f32.gmra.mxu0 %v268
        %v340 = vpop.f32.mrf.mxu0
        %v341 = vadd.f32 %v263, %v340
        %v342 = vpop.f32.mrf.mxu0
        %v343 = vadd.f32 %v265, %v342
        %344 = vdwg.mxu0
        %s345 = scalar_lea.vmem %s0, 48
        %v346 = vld [vmem:[%s345] sm:$0xff]
        %347 = vrot.lane.b32.xlu0 %v143, 96
        %v348 = vpop.permute.xlu0 %347
        %349 = vrot.lane.b32.xlu0 %v177, 96
        %v350 = vpop.permute.xlu0 %349
        %351 = vrot.lane.b32.xlu0 %v144, 96
        %v352 = vpop.permute.xlu0 %351
        %vm353 = vcmask 785408
        %v354 = vsel %vm353, %v348, %v350
        %v355 = vsel %vm353, %v350, %v352
        %v357 = vsel %vm187, %v346, 0
        %v359 = vsel %vm191, %v354, 0
        %v361 = vsel %vm191, %v355, 0
        %363 = vmatprep.subr.mxu0 0.0
        %364 = vmatpush1.msra.mxu0 0.0
        %365 = vmatprep.subr.mxu0 0.0
        %366 = vmatpush1.msra.mxu0 0.0
        %367 = vmatprep.subr.mxu0 0.0
        %368 = vmatpush1.msra.mxu0 0.0
        %369 = vmatprep.subr.mxu0 0.0
        %370 = vmatpush1.msra.mxu0 0.0
        %371 = vmatprep.subr.mxu0 0.0
        %372 = vmatpush1.msra.mxu0 0.0
        %373 = vmatprep.subr.mxu0 0.0
        %374 = vmatpush1.msra.mxu0 0.0
        %375 = vmatprep.subr.mxu0 0.0
        %376 = vmatpush1.msra.mxu0 0.0
        %377 = vmatprep.subr.mxu0 0.0
        %378 = vmatpush1.msra.mxu0 0.0
        %379 = vmatprep.subr.mxu0 0.0
        %380 = vmatpush1.msra.mxu0 0.0
        %381 = vmatprep.subr.mxu0 0.0
        %382 = vmatpush1.msra.mxu0 0.0
        %383 = vmatprep.subr.mxu0 0.0
        %384 = vmatpush1.msra.mxu0 0.0
        %385 = vmatprep.subr.mxu0 0.0
        %386 = vmatpush1.msra.mxu0 0.0
        %387 = vmatprep.subr.mxu0 0.0
        %388 = vmatpush1.msra.mxu0 0.0
        %389 = vmatprep.subr.mxu0 0.0
        %390 = vmatpush1.msra.mxu0 0.0
        %391 = vmatprep.subr.mxu0 0.0
        %392 = vmatpush1.msra.mxu0 0.0
        %393 = vmatprep.subr.mxu0 %v361
        %394 = vmatpush1.msra.mxu0 %v359
        %395 = vmatprep.subr.mxu0 0.0
        %396 = vmatpush2.msra.mxu0 0.0
        %397 = vmatprep.subr.mxu0 0.0
        %398 = vmatpush2.msra.mxu0 0.0
        %399 = vmatprep.subr.mxu0 0.0
        %400 = vmatpush2.msra.mxu0 0.0
        %401 = vmatprep.subr.mxu0 0.0
        %402 = vmatpush2.msra.mxu0 0.0
        %403 = vmatprep.subr.mxu0 0.0
        %404 = vmatpush2.msra.mxu0 0.0
        %405 = vmatprep.subr.mxu0 0.0
        %406 = vmatpush2.msra.mxu0 0.0
        %407 = vmatprep.subr.mxu0 0.0
        %408 = vmatpush2.msra.mxu0 0.0
        %409 = vmatprep.subr.mxu0 0.0
        %410 = vmatpush2.msra.mxu0 0.0
        %411 = vmatprep.subr.mxu0 0.0
        %412 = vmatpush2.msra.mxu0 0.0
        %413 = vmatprep.subr.mxu0 0.0
        %414 = vmatpush2.msra.mxu0 0.0
        %415 = vmatprep.subr.mxu0 0.0
        %416 = vmatpush2.msra.mxu0 0.0
        %417 = vmatprep.subr.mxu0 0.0
        %418 = vmatpush2.msra.mxu0 0.0
        %419 = vmatprep.subr.mxu0 0.0
        %420 = vmatpush2.msra.mxu0 0.0
        %421 = vmatprep.subr.mxu0 0.0
        %422 = vmatpush2.msra.mxu0 0.0
        %423 = vmatprep.subr.mxu0 0.0
        %424 = vmatpush2.msra.mxu0 0.0
        %425 = vmatprep.subr.mxu0 0.0
        %426 = vmatpush2.msra.mxu0 0.0
        %427 = vmatprep.mubr.f32.mxu0 0.0
        %428 = vmatmul.mubr.f32.gmra.mxu0 %v357
        %v429 = vpop.f32.mrf.mxu0
        %v430 = vadd.f32 0.0, %v429
        %v431 = vpop.f32.mrf.mxu0
        %v432 = vadd.f32 0.0, %v431
        %433 = vdwg.mxu0
        %v434 = vadd.f32 %v341, %v430
        %v435 = vadd.f32 %v343, %v432
        %vm436 = vcmp.ge.s32.totalorder %v170, 1
        %vm437 = vcmp.ge.s32.totalorder %v171, 1
        %v438 = vsel %vm436, %v434, 0.0
        %v439 = vsel %vm437, %v435, 0.0
        %v440 = vadd.f32 %v438, 0.0
        %v441 = vadd.f32 %v439, 0.0
        %s442 = scalar_lea.vmem %s0, 8
        %v443 = vld [vmem:[%s442] sm:$0xff]
        %s444 = scalar_lea.vmem %s0, 32
        %v445 = vld [vmem:[%s444] sm:$0xff]
        %446 = vrot.lane.b32.xlu0 %v143, 111
        %v447 = vpop.permute.xlu0 %446
        %448 = vrot.lane.b32.xlu0 %v177, 111
        %v449 = vpop.permute.xlu0 %448
        %450 = vrot.lane.b32.xlu0 %v144, 111
        %v451 = vpop.permute.xlu0 %450
        %vm452 = vcmask 908288
        %v453 = vsel %vm452, %v447, %v449
        %v454 = vsel %vm452, %v449, %v451
        %v456 = vsel %vm187, %v445, 0
        %v458 = vsel %vm191, %v453, 0
        %v460 = vsel %vm191, %v454, 0
        %462 = vmatprep.subr.mxu0 0.0
        %463 = vmatpush1.msra.mxu0 0.0
        %464 = vmatprep.subr.mxu0 0.0
        %465 = vmatpush1.msra.mxu0 0.0
        %466 = vmatprep.subr.mxu0 0.0
        %467 = vmatpush1.msra.mxu0 0.0
        %468 = vmatprep.subr.mxu0 0.0
        %469 = vmatpush1.msra.mxu0 0.0
        %470 = vmatprep.subr.mxu0 0.0
        %471 = vmatpush1.msra.mxu0 0.0
        %472 = vmatprep.subr.mxu0 0.0
        %473 = vmatpush1.msra.mxu0 0.0
        %474 = vmatprep.subr.mxu0 0.0
        %475 = vmatpush1.msra.mxu0 0.0
        %476 = vmatprep.subr.mxu0 0.0
        %477 = vmatpush1.msra.mxu0 0.0
        %478 = vmatprep.subr.mxu0 0.0
        %479 = vmatpush1.msra.mxu0 0.0
        %480 = vmatprep.subr.mxu0 0.0
        %481 = vmatpush1.msra.mxu0 0.0
        %482 = vmatprep.subr.mxu0 0.0
        %483 = vmatpush1.msra.mxu0 0.0
        %484 = vmatprep.subr.mxu0 0.0
        %485 = vmatpush1.msra.mxu0 0.0
        %486 = vmatprep.subr.mxu0 0.0
        %487 = vmatpush1.msra.mxu0 0.0
        %488 = vmatprep.subr.mxu0 0.0
        %489 = vmatpush1.msra.mxu0 0.0
        %490 = vmatprep.subr.mxu0 0.0
        %491 = vmatpush1.msra.mxu0 0.0
        %492 = vmatprep.subr.mxu0 %v460
        %493 = vmatpush1.msra.mxu0 %v458
        %494 = vmatprep.subr.mxu0 0.0
        %495 = vmatpush2.msra.mxu0 0.0
        %496 = vmatprep.subr.mxu0 0.0
        %497 = vmatpush2.msra.mxu0 0.0
        %498 = vmatprep.subr.mxu0 0.0
        %499 = vmatpush2.msra.mxu0 0.0
        %500 = vmatprep.subr.mxu0 0.0
        %501 = vmatpush2.msra.mxu0 0.0
        %502 = vmatprep.subr.mxu0 0.0
        %503 = vmatpush2.msra.mxu0 0.0
        %504 = vmatprep.subr.mxu0 0.0
        %505 = vmatpush2.msra.mxu0 0.0
        %506 = vmatprep.subr.mxu0 0.0
        %507 = vmatpush2.msra.mxu0 0.0
        %508 = vmatprep.subr.mxu0 0.0
        %509 = vmatpush2.msra.mxu0 0.0
        %510 = vmatprep.subr.mxu0 0.0
        %511 = vmatpush2.msra.mxu0 0.0
        %512 = vmatprep.subr.mxu0 0.0
        %513 = vmatpush2.msra.mxu0 0.0
        %514 = vmatprep.subr.mxu0 0.0
        %515 = vmatpush2.msra.mxu0 0.0
        %516 = vmatprep.subr.mxu0 0.0
        %517 = vmatpush2.msra.mxu0 0.0
        %518 = vmatprep.subr.mxu0 0.0
        %519 = vmatpush2.msra.mxu0 0.0
        %520 = vmatprep.subr.mxu0 0.0
        %521 = vmatpush2.msra.mxu0 0.0
        %522 = vmatprep.subr.mxu0 0.0
        %523 = vmatpush2.msra.mxu0 0.0
        %524 = vmatprep.subr.mxu0 0.0
        %525 = vmatpush2.msra.mxu0 0.0
        %526 = vmatprep.mubr.f32.mxu0 0.0
        %527 = vmatmul.mubr.f32.gmra.mxu0 %v456
        %v528 = vpop.f32.mrf.mxu0
        %v529 = vadd.f32 0.0, %v528
        %v530 = vpop.f32.mrf.mxu0
        %v531 = vadd.f32 0.0, %v530
        %532 = vdwg.mxu0
        %533 = vrot.lane.b32.xlu0 %v143, 127
        %v534 = vpop.permute.xlu0 %533
        %535 = vrot.lane.b32.xlu0 %v177, 127
        %v536 = vpop.permute.xlu0 %535
        %537 = vrot.lane.b32.xlu0 %v144, 127
        %v538 = vpop.permute.xlu0 %537
        %vm539 = vcmask 1039360
        %v540 = vsel %vm539, %v534, %v536
        %v541 = vsel %vm539, %v536, %v538
        %v543 = vsel %vm187, %v443, 0
        %v545 = vsel %vm191, %v540, 0
        %v547 = vsel %vm191, %v541, 0
        %549 = vmatprep.subr.mxu0 0.0
        %550 = vmatpush1.msra.mxu0 0.0
        %551 = vmatprep.subr.mxu0 0.0
        %552 = vmatpush1.msra.mxu0 0.0
        %553 = vmatprep.subr.mxu0 0.0
        %554 = vmatpush1.msra.mxu0 0.0
        %555 = vmatprep.subr.mxu0 0.0
        %556 = vmatpush1.msra.mxu0 0.0
        %557 = vmatprep.subr.mxu0 0.0
        %558 = vmatpush1.msra.mxu0 0.0
        %559 = vmatprep.subr.mxu0 0.0
        %560 = vmatpush1.msra.mxu0 0.0
        %561 = vmatprep.subr.mxu0 0.0
        %562 = vmatpush1.msra.mxu0 0.0
        %563 = vmatprep.subr.mxu0 0.0
        %564 = vmatpush1.msra.mxu0 0.0
        %565 = vmatprep.subr.mxu0 0.0
        %566 = vmatpush1.msra.mxu0 0.0
        %567 = vmatprep.subr.mxu0 0.0
        %568 = vmatpush1.msra.mxu0 0.0
        %569 = vmatprep.subr.mxu0 0.0
        %570 = vmatpush1.msra.mxu0 0.0
        %571 = vmatprep.subr.mxu0 0.0
        %572 = vmatpush1.msra.mxu0 0.0
        %573 = vmatprep.subr.mxu0 0.0
        %574 = vmatpush1.msra.mxu0 0.0
        %575 = vmatprep.subr.mxu0 0.0
        %576 = vmatpush1.msra.mxu0 0.0
        %577 = vmatprep.subr.mxu0 0.0
        %578 = vmatpush1.msra.mxu0 0.0
        %579 = vmatprep.subr.mxu0 %v547
        %580 = vmatpush1.msra.mxu0 %v545
        %581 = vmatprep.subr.mxu0 0.0
        %582 = vmatpush2.msra.mxu0 0.0
        %583 = vmatprep.subr.mxu0 0.0
        %584 = vmatpush2.msra.mxu0 0.0
        %585 = vmatprep.subr.mxu0 0.0
        %586 = vmatpush2.msra.mxu0 0.0
        %587 = vmatprep.subr.mxu0 0.0
        %588 = vmatpush2.msra.mxu0 0.0
        %589 = vmatprep.subr.mxu0 0.0
        %590 = vmatpush2.msra.mxu0 0.0
        %591 = vmatprep.subr.mxu0 0.0
        %592 = vmatpush2.msra.mxu0 0.0
        %593 = vmatprep.subr.mxu0 0.0
        %594 = vmatpush2.msra.mxu0 0.0
        %595 = vmatprep.subr.mxu0 0.0
        %596 = vmatpush2.msra.mxu0 0.0
        %597 = vmatprep.subr.mxu0 0.0
        %598 = vmatpush2.msra.mxu0 0.0
        %599 = vmatprep.subr.mxu0 0.0
        %600 = vmatpush2.msra.mxu0 0.0
        %601 = vmatprep.subr.mxu0 0.0
        %602 = vmatpush2.msra.mxu0 0.0
        %603 = vmatprep.subr.mxu0 0.0
        %604 = vmatpush2.msra.mxu0 0.0
        %605 = vmatprep.subr.mxu0 0.0
        %606 = vmatpush2.msra.mxu0 0.0
        %607 = vmatprep.subr.mxu0 0.0
        %608 = vmatpush2.msra.mxu0 0.0
        %609 = vmatprep.subr.mxu0 0.0
        %610 = vmatpush2.msra.mxu0 0.0
        %611 = vmatprep.subr.mxu0 0.0
        %612 = vmatpush2.msra.mxu0 0.0
        %613 = vmatprep.mubr.f32.mxu0 0.0
        %614 = vmatmul.mubr.f32.gmra.mxu0 %v543
        %v615 = vpop.f32.mrf.mxu0
        %v616 = vadd.f32 %v529, %v615
        %v617 = vpop.f32.mrf.mxu0
        %v618 = vadd.f32 %v531, %v617
        %619 = vdwg.mxu0
        %s620 = scalar_lea.vmem %s0, 56
        %v621 = vld [vmem:[%s620] sm:$0xff]
        %622 = vrot.lane.b32.xlu0 %v143, 95
        %v623 = vpop.permute.xlu0 %622
        %624 = vrot.lane.b32.xlu0 %v177, 95
        %v625 = vpop.permute.xlu0 %624
        %626 = vrot.lane.b32.xlu0 %v144, 95
        %v627 = vpop.permute.xlu0 %626
        %vm628 = vcmask 777216
        %v629 = vsel %vm628, %v623, %v625
        %v630 = vsel %vm628, %v625, %v627
        %v632 = vsel %vm187, %v621, 0
        %v634 = vsel %vm191, %v629, 0
        %v636 = vsel %vm191, %v630, 0
        %638 = vmatprep.subr.mxu0 0.0
        %639 = vmatpush1.msra.mxu0 0.0
        %640 = vmatprep.subr.mxu0 0.0
        %641 = vmatpush1.msra.mxu0 0.0
        %642 = vmatprep.subr.mxu0 0.0
        %643 = vmatpush1.msra.mxu0 0.0
        %644 = vmatprep.subr.mxu0 0.0
        %645 = vmatpush1.msra.mxu0 0.0
        %646 = vmatprep.subr.mxu0 0.0
        %647 = vmatpush1.msra.mxu0 0.0
        %648 = vmatprep.subr.mxu0 0.0
        %649 = vmatpush1.msra.mxu0 0.0
        %650 = vmatprep.subr.mxu0 0.0
        %651 = vmatpush1.msra.mxu0 0.0
        %652 = vmatprep.subr.mxu0 0.0
        %653 = vmatpush1.msra.mxu0 0.0
        %654 = vmatprep.subr.mxu0 0.0
        %655 = vmatpush1.msra.mxu0 0.0
        %656 = vmatprep.subr.mxu0 0.0
        %657 = vmatpush1.msra.mxu0 0.0
        %658 = vmatprep.subr.mxu0 0.0
        %659 = vmatpush1.msra.mxu0 0.0
        %660 = vmatprep.subr.mxu0 0.0
        %661 = vmatpush1.msra.mxu0 0.0
        %662 = vmatprep.subr.mxu0 0.0
        %663 = vmatpush1.msra.mxu0 0.0
        %664 = vmatprep.subr.mxu0 0.0
        %665 = vmatpush1.msra.mxu0 0.0
        %666 = vmatprep.subr.mxu0 0.0
        %667 = vmatpush1.msra.mxu0 0.0
        %668 = vmatprep.subr.mxu0 %v636
        %669 = vmatpush1.msra.mxu0 %v634
        %670 = vmatprep.subr.mxu0 0.0
        %671 = vmatpush2.msra.mxu0 0.0
        %672 = vmatprep.subr.mxu0 0.0
        %673 = vmatpush2.msra.mxu0 0.0
        %674 = vmatprep.subr.mxu0 0.0
        %675 = vmatpush2.msra.mxu0 0.0
        %676 = vmatprep.subr.mxu0 0.0
        %677 = vmatpush2.msra.mxu0 0.0
        %678 = vmatprep.subr.mxu0 0.0
        %679 = vmatpush2.msra.mxu0 0.0
        %680 = vmatprep.subr.mxu0 0.0
        %681 = vmatpush2.msra.mxu0 0.0
        %682 = vmatprep.subr.mxu0 0.0
        %683 = vmatpush2.msra.mxu0 0.0
        %684 = vmatprep.subr.mxu0 0.0
        %685 = vmatpush2.msra.mxu0 0.0
        %686 = vmatprep.subr.mxu0 0.0
        %687 = vmatpush2.msra.mxu0 0.0
        %688 = vmatprep.subr.mxu0 0.0
        %689 = vmatpush2.msra.mxu0 0.0
        %690 = vmatprep.subr.mxu0 0.0
        %691 = vmatpush2.msra.mxu0 0.0
        %692 = vmatprep.subr.mxu0 0.0
        %693 = vmatpush2.msra.mxu0 0.0
        %694 = vmatprep.subr.mxu0 0.0
        %695 = vmatpush2.msra.mxu0 0.0
        %696 = vmatprep.subr.mxu0 0.0
        %697 = vmatpush2.msra.mxu0 0.0
        %698 = vmatprep.subr.mxu0 0.0
        %699 = vmatpush2.msra.mxu0 0.0
        %700 = vmatprep.subr.mxu0 0.0
        %701 = vmatpush2.msra.mxu0 0.0
        %702 = vmatprep.mubr.f32.mxu0 0.0
        %703 = vmatmul.mubr.f32.gmra.mxu0 %v632
        %v704 = vpop.f32.mrf.mxu0
        %v705 = vadd.f32 0.0, %v704
        %v706 = vpop.f32.mrf.mxu0
        %v707 = vadd.f32 0.0, %v706
        %708 = vdwg.mxu0
        %v709 = vadd.f32 %v616, %v705
        %v710 = vadd.f32 %v618, %v707
        %v711 = vadd.f32 %v440, %v709
        %v712 = vadd.f32 %v441, %v710
        %s713 = scalar_lea.vmem %s0, 16
        %v714 = vld [vmem:[%s713] sm:$0xff]
        %s715 = scalar_lea.vmem %s0, 40
        %v716 = vld [vmem:[%s715] sm:$0xff]
        %717 = vrot.lane.b32.xlu0 %v143, 110
        %v718 = vpop.permute.xlu0 %717
        %719 = vrot.lane.b32.xlu0 %v177, 110
        %v720 = vpop.permute.xlu0 %719
        %721 = vrot.lane.b32.xlu0 %v144, 110
        %v722 = vpop.permute.xlu0 %721
        %vm723 = vcmask 900096
        %v724 = vsel %vm723, %v718, %v720
        %v725 = vsel %vm723, %v720, %v722
        %v727 = vsel %vm187, %v716, 0
        %v729 = vsel %vm191, %v724, 0
        %v731 = vsel %vm191, %v725, 0
        %733 = vmatprep.subr.mxu0 0.0
        %734 = vmatpush1.msra.mxu0 0.0
        %735 = vmatprep.subr.mxu0 0.0
        %736 = vmatpush1.msra.mxu0 0.0
        %737 = vmatprep.subr.mxu0 0.0
        %738 = vmatpush1.msra.mxu0 0.0
        %739 = vmatprep.subr.mxu0 0.0
        %740 = vmatpush1.msra.mxu0 0.0
        %741 = vmatprep.subr.mxu0 0.0
        %742 = vmatpush1.msra.mxu0 0.0
        %743 = vmatprep.subr.mxu0 0.0
        %744 = vmatpush1.msra.mxu0 0.0
        %745 = vmatprep.subr.mxu0 0.0
        %746 = vmatpush1.msra.mxu0 0.0
        %747 = vmatprep.subr.mxu0 0.0
        %748 = vmatpush1.msra.mxu0 0.0
        %749 = vmatprep.subr.mxu0 0.0
        %750 = vmatpush1.msra.mxu0 0.0
        %751 = vmatprep.subr.mxu0 0.0
        %752 = vmatpush1.msra.mxu0 0.0
        %753 = vmatprep.subr.mxu0 0.0
        %754 = vmatpush1.msra.mxu0 0.0
        %755 = vmatprep.subr.mxu0 0.0
        %756 = vmatpush1.msra.mxu0 0.0
        %757 = vmatprep.subr.mxu0 0.0
        %758 = vmatpush1.msra.mxu0 0.0
        %759 = vmatprep.subr.mxu0 0.0
        %760 = vmatpush1.msra.mxu0 0.0
        %761 = vmatprep.subr.mxu0 0.0
        %762 = vmatpush1.msra.mxu0 0.0
        %763 = vmatprep.subr.mxu0 %v731
        %764 = vmatpush1.msra.mxu0 %v729
        %765 = vmatprep.subr.mxu0 0.0
        %766 = vmatpush2.msra.mxu0 0.0
        %767 = vmatprep.subr.mxu0 0.0
        %768 = vmatpush2.msra.mxu0 0.0
        %769 = vmatprep.subr.mxu0 0.0
        %770 = vmatpush2.msra.mxu0 0.0
        %771 = vmatprep.subr.mxu0 0.0
        %772 = vmatpush2.msra.mxu0 0.0
        %773 = vmatprep.subr.mxu0 0.0
        %774 = vmatpush2.msra.mxu0 0.0
        %775 = vmatprep.subr.mxu0 0.0
        %776 = vmatpush2.msra.mxu0 0.0
        %777 = vmatprep.subr.mxu0 0.0
        %778 = vmatpush2.msra.mxu0 0.0
        %779 = vmatprep.subr.mxu0 0.0
        %780 = vmatpush2.msra.mxu0 0.0
        %781 = vmatprep.subr.mxu0 0.0
        %782 = vmatpush2.msra.mxu0 0.0
        %783 = vmatprep.subr.mxu0 0.0
        %784 = vmatpush2.msra.mxu0 0.0
        %785 = vmatprep.subr.mxu0 0.0
        %786 = vmatpush2.msra.mxu0 0.0
        %787 = vmatprep.subr.mxu0 0.0
        %788 = vmatpush2.msra.mxu0 0.0
        %789 = vmatprep.subr.mxu0 0.0
        %790 = vmatpush2.msra.mxu0 0.0
        %791 = vmatprep.subr.mxu0 0.0
        %792 = vmatpush2.msra.mxu0 0.0
        %793 = vmatprep.subr.mxu0 0.0
        %794 = vmatpush2.msra.mxu0 0.0
        %795 = vmatprep.subr.mxu0 0.0
        %796 = vmatpush2.msra.mxu0 0.0
        %797 = vmatprep.mubr.f32.mxu0 0.0
        %798 = vmatmul.mubr.f32.gmra.mxu0 %v727
        %v799 = vpop.f32.mrf.mxu0
        %v800 = vadd.f32 0.0, %v799
        %v801 = vpop.f32.mrf.mxu0
        %v802 = vadd.f32 0.0, %v801
        %803 = vdwg.mxu0
        %804 = vrot.lane.b32.xlu0 %v143, 126
        %v805 = vpop.permute.xlu0 %804
        %806 = vrot.lane.b32.xlu0 %v177, 126
        %v807 = vpop.permute.xlu0 %806
        %808 = vrot.lane.b32.xlu0 %v144, 126
        %v809 = vpop.permute.xlu0 %808
        %vm810 = vcmask 1031168
        %v811 = vsel %vm810, %v805, %v807
        %v812 = vsel %vm810, %v807, %v809
        %v814 = vsel %vm187, %v714, 0
        %v816 = vsel %vm191, %v811, 0
        %v818 = vsel %vm191, %v812, 0
        %820 = vmatprep.subr.mxu0 0.0
        %821 = vmatpush1.msra.mxu0 0.0
        %822 = vmatprep.subr.mxu0 0.0
        %823 = vmatpush1.msra.mxu0 0.0
        %824 = vmatprep.subr.mxu0 0.0
        %825 = vmatpush1.msra.mxu0 0.0
        %826 = vmatprep.subr.mxu0 0.0
        %827 = vmatpush1.msra.mxu0 0.0
        %828 = vmatprep.subr.mxu0 0.0
        %829 = vmatpush1.msra.mxu0 0.0
        %830 = vmatprep.subr.mxu0 0.0
        %831 = vmatpush1.msra.mxu0 0.0
        %832 = vmatprep.subr.mxu0 0.0
        %833 = vmatpush1.msra.mxu0 0.0
        %834 = vmatprep.subr.mxu0 0.0
        %835 = vmatpush1.msra.mxu0 0.0
        %836 = vmatprep.subr.mxu0 0.0
        %837 = vmatpush1.msra.mxu0 0.0
        %838 = vmatprep.subr.mxu0 0.0
        %839 = vmatpush1.msra.mxu0 0.0
        %840 = vmatprep.subr.mxu0 0.0
        %841 = vmatpush1.msra.mxu0 0.0
        %842 = vmatprep.subr.mxu0 0.0
        %843 = vmatpush1.msra.mxu0 0.0
        %844 = vmatprep.subr.mxu0 0.0
        %845 = vmatpush1.msra.mxu0 0.0
        %846 = vmatprep.subr.mxu0 0.0
        %847 = vmatpush1.msra.mxu0 0.0
        %848 = vmatprep.subr.mxu0 0.0
        %849 = vmatpush1.msra.mxu0 0.0
        %850 = vmatprep.subr.mxu0 %v818
        %851 = vmatpush1.msra.mxu0 %v816
        %852 = vmatprep.subr.mxu0 0.0
        %853 = vmatpush2.msra.mxu0 0.0
        %854 = vmatprep.subr.mxu0 0.0
        %855 = vmatpush2.msra.mxu0 0.0
        %856 = vmatprep.subr.mxu0 0.0
        %857 = vmatpush2.msra.mxu0 0.0
        %858 = vmatprep.subr.mxu0 0.0
        %859 = vmatpush2.msra.mxu0 0.0
        %860 = vmatprep.subr.mxu0 0.0
        %861 = vmatpush2.msra.mxu0 0.0
        %862 = vmatprep.subr.mxu0 0.0
        %863 = vmatpush2.msra.mxu0 0.0
        %864 = vmatprep.subr.mxu0 0.0
        %865 = vmatpush2.msra.mxu0 0.0
        %866 = vmatprep.subr.mxu0 0.0
        %867 = vmatpush2.msra.mxu0 0.0
        %868 = vmatprep.subr.mxu0 0.0
        %869 = vmatpush2.msra.mxu0 0.0
        %870 = vmatprep.subr.mxu0 0.0
        %871 = vmatpush2.msra.mxu0 0.0
        %872 = vmatprep.subr.mxu0 0.0
        %873 = vmatpush2.msra.mxu0 0.0
        %874 = vmatprep.subr.mxu0 0.0
        %875 = vmatpush2.msra.mxu0 0.0
        %876 = vmatprep.subr.mxu0 0.0
        %877 = vmatpush2.msra.mxu0 0.0
        %878 = vmatprep.subr.mxu0 0.0
        %879 = vmatpush2.msra.mxu0 0.0
        %880 = vmatprep.subr.mxu0 0.0
        %881 = vmatpush2.msra.mxu0 0.0
        %882 = vmatprep.subr.mxu0 0.0
        %883 = vmatpush2.msra.mxu0 0.0
        %884 = vmatprep.mubr.f32.mxu0 0.0
        %885 = vmatmul.mubr.f32.gmra.mxu0 %v814
        %v886 = vpop.f32.mrf.mxu0
        %v887 = vadd.f32 %v800, %v886
        %v888 = vpop.f32.mrf.mxu0
        %v889 = vadd.f32 %v802, %v888
        %890 = vdwg.mxu0
        %s891 = scalar_lea.vmem %s0, 64
        %v892 = vld [vmem:[%s891] sm:$0xff]
        %893 = vrot.lane.b32.xlu0 %v143, 94
        %v894 = vpop.permute.xlu0 %893
        %895 = vrot.lane.b32.xlu0 %v177, 94
        %v896 = vpop.permute.xlu0 %895
        %897 = vrot.lane.b32.xlu0 %v144, 94
        %v898 = vpop.permute.xlu0 %897
        %vm899 = vcmask 769024
        %v900 = vsel %vm899, %v894, %v896
        %v901 = vsel %vm899, %v896, %v898
        %v903 = vsel %vm187, %v892, 0
        %v905 = vsel %vm191, %v900, 0
        %v907 = vsel %vm191, %v901, 0
        %909 = vmatprep.subr.mxu0 0.0
        %910 = vmatpush1.msra.mxu0 0.0
        %911 = vmatprep.subr.mxu0 0.0
        %912 = vmatpush1.msra.mxu0 0.0
        %913 = vmatprep.subr.mxu0 0.0
        %914 = vmatpush1.msra.mxu0 0.0
        %915 = vmatprep.subr.mxu0 0.0
        %916 = vmatpush1.msra.mxu0 0.0
        %917 = vmatprep.subr.mxu0 0.0
        %918 = vmatpush1.msra.mxu0 0.0
        %919 = vmatprep.subr.mxu0 0.0
        %920 = vmatpush1.msra.mxu0 0.0
        %921 = vmatprep.subr.mxu0 0.0
        %922 = vmatpush1.msra.mxu0 0.0
        %923 = vmatprep.subr.mxu0 0.0
        %924 = vmatpush1.msra.mxu0 0.0
        %925 = vmatprep.subr.mxu0 0.0
        %926 = vmatpush1.msra.mxu0 0.0
        %927 = vmatprep.subr.mxu0 0.0
        %928 = vmatpush1.msra.mxu0 0.0
        %929 = vmatprep.subr.mxu0 0.0
        %930 = vmatpush1.msra.mxu0 0.0
        %931 = vmatprep.subr.mxu0 0.0
        %932 = vmatpush1.msra.mxu0 0.0
        %933 = vmatprep.subr.mxu0 0.0
        %934 = vmatpush1.msra.mxu0 0.0
        %935 = vmatprep.subr.mxu0 0.0
        %936 = vmatpush1.msra.mxu0 0.0
        %937 = vmatprep.subr.mxu0 0.0
        %938 = vmatpush1.msra.mxu0 0.0
        %939 = vmatprep.subr.mxu0 %v907
        %940 = vmatpush1.msra.mxu0 %v905
        %941 = vmatprep.subr.mxu0 0.0
        %942 = vmatpush2.msra.mxu0 0.0
        %943 = vmatprep.subr.mxu0 0.0
        %944 = vmatpush2.msra.mxu0 0.0
        %945 = vmatprep.subr.mxu0 0.0
        %946 = vmatpush2.msra.mxu0 0.0
        %947 = vmatprep.subr.mxu0 0.0
        %948 = vmatpush2.msra.mxu0 0.0
        %949 = vmatprep.subr.mxu0 0.0
        %950 = vmatpush2.msra.mxu0 0.0
        %951 = vmatprep.subr.mxu0 0.0
        %952 = vmatpush2.msra.mxu0 0.0
        %953 = vmatprep.subr.mxu0 0.0
        %954 = vmatpush2.msra.mxu0 0.0
        %955 = vmatprep.subr.mxu0 0.0
        %956 = vmatpush2.msra.mxu0 0.0
        %957 = vmatprep.subr.mxu0 0.0
        %958 = vmatpush2.msra.mxu0 0.0
        %959 = vmatprep.subr.mxu0 0.0
        %960 = vmatpush2.msra.mxu0 0.0
        %961 = vmatprep.subr.mxu0 0.0
        %962 = vmatpush2.msra.mxu0 0.0
        %963 = vmatprep.subr.mxu0 0.0
        %964 = vmatpush2.msra.mxu0 0.0
        %965 = vmatprep.subr.mxu0 0.0
        %966 = vmatpush2.msra.mxu0 0.0
        %967 = vmatprep.subr.mxu0 0.0
        %968 = vmatpush2.msra.mxu0 0.0
        %969 = vmatprep.subr.mxu0 0.0
        %970 = vmatpush2.msra.mxu0 0.0
        %971 = vmatprep.subr.mxu0 0.0
        %972 = vmatpush2.msra.mxu0 0.0
        %973 = vmatprep.mubr.f32.mxu0 0.0
        %974 = vmatmul.mubr.f32.gmra.mxu0 %v903
        %v975 = vpop.f32.mrf.mxu0
        %v976 = vadd.f32 0.0, %v975
        %v977 = vpop.f32.mrf.mxu0
        %v978 = vadd.f32 0.0, %v977
        %979 = vdwg.mxu0
        %v980 = vadd.f32 %v887, %v976
        %v981 = vadd.f32 %v889, %v978
        %vm982 = vcmp.le.s32.totalorder %v170, 14
        %vm983 = vcmp.le.s32.totalorder %v171, 14
        %v984 = vsel %vm982, %v980, 0.0
        %v985 = vsel %vm983, %v981, 0.0
        %v986 = vadd.f32 %v711, %v984
        %v987 = vadd.f32 %v712, %v985
        %988 = vst [vmem:[%s136] sm:$0xff] %v986
        %989 = vst [vmem:[%s136 + $0x8] sm:$0xff] %v987
        %s990 = sand.u32 %s71, 1
        %s991 = scalar_lea.sflag [#allocation3], %s990
        %s992 = sand.u32 %s71, 1
        %s993 = smul.addr %s992, 16
        %s994 = scalar_lea.vmem [#allocation2], %s993
        // Predicated region
        $region29: #{tpu_custom_call.1} parent=27 // pred_check
          %p995 = pneg %p81
        $region30: #{tpu_custom_call.1} parent=27 // pred_check_branch
          %997 = sbr.rel (%p995) target = $region32
        $region31: #{tpu_custom_call.1} parent=27 // pred_region
          %s998 = smul.u32 2, %s16
          %s1000 = ssub.s32 256, 256
          %1001 = vsyncadd %s991, %s1000
          %s1002 = smul.addr %s998, 128
          %s1003 = scalar_lea.hbm %s2, %s1002
          %s1005 = sshll.u32 %s994, 4
          %s1006 = int_to_ptr.vmem [resolvable:$true] %s1005
          %1008 = dma.vmem_to_hbm [thread:$0]  %s1006, 256, %s1003, %s991
        $region32: #{tpu_custom_call.1} parent=27 // pred_fallthru
          _
      $region28: #{tpu_custom_call.1} parent=5 // pred_fallthru
        _
      %p1009 = scmp.le.s32.totalorder 2, %s11
      // Predicated region
      $region33: #{tpu_custom_call.1} parent=5 // pred_check
        %p1010 = pneg %p1009
      $region34: #{tpu_custom_call.1} parent=5 // pred_check_branch
        %1012 = sbr.rel (%p1010) target = $region36
      $region35: #{tpu_custom_call.1} parent=5 // pred_region
        %s1013 = ssub.s32 %s11, 2
        // Predicated region
        $region37: #{tpu_custom_call.1} parent=35 // pred_check
          %p1014 = pneg %p87
        $region38: #{tpu_custom_call.1} parent=35 // pred_check_branch
          %1016 = sbr.rel (%p1014) target = $region40
        $region39: #{tpu_custom_call.1} parent=35 // pred_region
          %s1017 = sand.u32 %s72, 1
          %s1018 = scalar_lea.sflag [#allocation3], %s1017
          %s1019 = sand.u32 %s72, 1
          %s1020 = smul.addr %s1019, 16
          %s1021 = scalar_lea.vmem [#allocation2], %s1020
          %1022 = dma.done %s1018, 256
        $region40: #{tpu_custom_call.1} parent=35 // pred_fallthru
          _
      $region36: #{tpu_custom_call.1} parent=5 // pred_fallthru
        _
    $region6: #{tpu_custom_call.1} parent=1 // loop_footer
      %s15 = sadd.s32 1, %s11
    $region7: #{tpu_custom_call.1} parent=1 // loop_footer_branch
      %10 = sbr.rel target = $region3
    $region8: #{tpu_custom_call.1} parent=1 // loop_exit
      _
    %1023 = vsyncpa [#allocation3], 1
    %s1024 = scalar_lea.sflag [#allocation3], 1
    %1025 = vsyncpa %s1024, 1

</llo_original>
